<compile_context>
chip_gen: v6e
topology: v6e:2x2x1
jax: 0.10.0
libtpu: 0.0.40
codegen_flags: <defaults>
</compile_context>

<pallas_src>
import functools

import jax
import jax.numpy as jnp
from jax import lax
from jax.experimental import pallas as pl
from jax.experimental.pallas import tpu as pltpu

# ----------------------------------------------------------------------------
# Model hyper-parameters (synthetic, deterministic — stands in for m_Q.covariate_net)
# covariate_net: Linear(D->H) -> tanh -> Linear(H->H) -> tanh -> Linear(H->P)
# ----------------------------------------------------------------------------
D_IN = 8      # covariate dimension
H_DIM = 32    # hidden width
P_FEAT = 16   # feature (phi) dimension
SIGMA_F = 0.5 # self.sigma_f

# Tile caps for the gridded (large-N) fallback paths. 256x256 f32 output tile
# (256 KiB) + double-buffered (256, D_IN) inputs + weights << 32 MiB scoped
# VMEM default, so this is safe on v5e/v6e/v7x alike.
TM = 256
TN = 256
TD = 512

_VMEM = pl.BlockSpec(memory_space=pltpu.MemorySpace.VMEM)


# ----------------------------------------------------------------------------
# In-kernel helpers
# ----------------------------------------------------------------------------
def _phi(x, w1, b1, w2, b2, w3, b3):
    """phi(x) = Linear->tanh->Linear->tanh->Linear, f32 accumulation on MXU."""
    h = jnp.tanh(jnp.dot(x, w1, preferred_element_type=jnp.float32) + b1)
    h = jnp.tanh(jnp.dot(h, w2, preferred_element_type=jnp.float32) + b2)
    return jnp.dot(h, w3, preferred_element_type=jnp.float32) + b3


def _gram_vt(v1, v2):
    """v1 @ v2^T without materializing the transpose (contract dim 1 of both)."""
    return lax.dot_general(
        v1, v2, (((1,), (1,)), ((), ())), preferred_element_type=jnp.float32
    )


def _diag_row(v1, v2, sigma_f):
    """[1, N] row of sum_j v1[i,j]*v2[i,j] * sigma_f (lane-dense output)."""
    p = v1 * v2
    ones = jnp.ones((1, p.shape[1]), jnp.float32)
    return _gram_vt(ones, p) * sigma_f


# ----------------------------------------------------------------------------
# Fused Pallas kernels (phi + Gram / diag in one body)
# ----------------------------------------------------------------------------
def _self_gram_kernel(x_ref, w1, b1, w2, b2, w3, b3, o_ref, *, sigma_f):
    # Single-input branch: compute v once, reuse for both matmul operands.
    v = _phi(x_ref[...], w1[...], b1[...], w2[...], b2[...], w3[...], b3[...])
    o_ref[...] = _gram_vt(v, v) * sigma_f


def _cross_gram_kernel(x1_ref, x2_ref, w1, b1, w2, b2, w3, b3, o_ref, *, sigma_f):
    w = (w1[...], b1[...], w2[...], b2[...], w3[...], b3[...])
    v1 = _phi(x1_ref[...], *w)
    v2 = _phi(x2_ref[...], *w)
    o_ref[...] = _gram_vt(v1, v2) * sigma_f


def _self_diag_kernel(x_ref, w1, b1, w2, b2, w3, b3, o_ref, *, sigma_f):
    v = _phi(x_ref[...], w1[...], b1[...], w2[...], b2[...], w3[...], b3[...])
    o_ref[...] = _diag_row(v, v, sigma_f)            # [1, N] lane-dense


def _cross_diag_kernel(x1_ref, x2_ref, w1, b1, w2, b2, w3, b3, o_ref, *, sigma_f):
    w = (w1[...], b1[...], w2[...], b2[...], w3[...], b3[...])
    v1 = _phi(x1_ref[...], *w)
    v2 = _phi(x2_ref[...], *w)
    o_ref[...] = _diag_row(v1, v2, sigma_f)          # [1, N] lane-dense


# ----------------------------------------------------------------------------
# pallas_call wrappers (all of this traces once under the jitted forward)
# ----------------------------------------------------------------------------
def _weight_specs(index_map):
    return [
        pl.BlockSpec((D_IN, H_DIM), index_map),
        pl.BlockSpec((1, H_DIM), index_map),
        pl.BlockSpec((H_DIM, H_DIM), index_map),
        pl.BlockSpec((1, H_DIM), index_map),
        pl.BlockSpec((H_DIM, P_FEAT), index_map),
        pl.BlockSpec((1, P_FEAT), index_map),
    ]


def _fused_cross_gram(x1, x2, params, sigma_f):
    """Tiled fused Gram: K[i,j] tile = phi(x1_tile_i) @ phi(x2_tile_j)^T * sigma_f."""
    n1, n2 = x1.shape[0], x2.shape[0]
    tm, tn = min(n1, TM), min(n2, TN)
    grid = (pl.cdiv(n1, tm), pl.cdiv(n2, tn))
    in_specs = [
        pl.BlockSpec((tm, D_IN), lambda i, j: (i, 0)),
        pl.BlockSpec((tn, D_IN), lambda i, j: (j, 0)),
        # Weights are constant-index blocks: re-fetch is skipped when the block
        # index does not change between grid steps.
        *_weight_specs(lambda i, j: (0, 0)),
    ]
    return pl.pallas_call(
        functools.partial(_cross_gram_kernel, sigma_f=sigma_f),
        out_shape=jax.ShapeDtypeStruct((n1, n2), jnp.float32),
        grid=grid,
        in_specs=in_specs,
        out_specs=pl.BlockSpec((tm, tn), lambda i, j: (i, j)),
        compiler_params=pltpu.CompilerParams(
            dimension_semantics=("parallel", "parallel")),
    )(x1, x2, *params)


def _fused_self_gram(x, params, sigma_f):
    n = x.shape[0]
    if n <= TM:
        # Whole problem in one VMEM tile: compute v once, reuse for v @ v^T.
        return pl.pallas_call(
            functools.partial(_self_gram_kernel, sigma_f=sigma_f),
            out_shape=jax.ShapeDtypeStruct((n, n), jnp.float32),
            in_specs=[_VMEM] * 7,
            out_specs=_VMEM,
        )(x, *params)
    # Large-N fallback: tiled grid, phi recomputed per tile (MLP is tiny).
    return _fused_cross_gram(x, x, params, sigma_f)


def _fused_cross_diag_row(x1, x2, params, sigma_f):
    """Tiled fused diag as a lane-dense [1, N] row."""
    n = x1.shape[0]
    td = min(n, TD)
    grid = (pl.cdiv(n, td),)
    in_specs = [
        pl.BlockSpec((td, D_IN), lambda i: (i, 0)),
        pl.BlockSpec((td, D_IN), lambda i: (i, 0)),
        *_weight_specs(lambda i: (0, 0)),
    ]
    return pl.pallas_call(
        functools.partial(_cross_diag_kernel, sigma_f=sigma_f),
        out_shape=jax.ShapeDtypeStruct((1, n), jnp.float32),
        grid=grid,
        in_specs=in_specs,
        out_specs=pl.BlockSpec((1, td), lambda i: (0, i)),
        compiler_params=pltpu.CompilerParams(
            dimension_semantics=("parallel",)),
    )(x1, x2, *params)


def _fused_self_diag_row(x, params, sigma_f):
    n = x.shape[0]
    if n <= TD:
        return pl.pallas_call(
            functools.partial(_self_diag_kernel, sigma_f=sigma_f),
            out_shape=jax.ShapeDtypeStruct((1, n), jnp.float32),
            in_specs=[_VMEM] * 7,
            out_specs=_VMEM,
        )(x, *params)
    return _fused_cross_diag_row(x, x, params, sigma_f)


# ----------------------------------------------------------------------------
# Top-level forward (mirrors neural_network_kernel_lol.forward), jitted once
# per input signature so the pallas kernels are traced/compiled only once.
# ----------------------------------------------------------------------------
@functools.partial(jax.jit, static_argnames=("sigma_f",))
def neural_network_kernel_forward(x1, x2=None, *, params, sigma_f=SIGMA_F):
    if x2 is None:
        if x1.ndim == 3:
            xs = jnp.squeeze(x1, axis=1)
            row = _fused_self_diag_row(xs, params, sigma_f)          # [1, N]
            return row.reshape(xs.shape[0], 1, 1)                    # [N, 1, 1]
        return _fused_self_gram(x1, params, sigma_f)                 # [N, N]
    if x1.ndim == 3:
        x1s = jnp.squeeze(x1, axis=1)
        x2s = jnp.squeeze(x2, axis=1)
        row = _fused_cross_diag_row(x1s, x2s, params, sigma_f)       # [1, N]
        return row.reshape(x1s.shape[0], 1, 1)                       # [N, 1, 1]
    return _fused_cross_gram(x1, x2, params, sigma_f)                # [N1, N2]


# ----------------------------------------------------------------------------
# Pure-JAX reference (for correctness check)
# ----------------------------------------------------------------------------
def _phi_ref(x, params):
    w1, b1, w2, b2, w3, b3 = params
    h = jnp.tanh(x @ w1 + b1)
    h = jnp.tanh(h @ w2 + b2)
    return h @ w3 + b3


def _forward_ref(x1, x2, params, sigma_f):
    if x2 is None:
        if x1.ndim == 3:
            v = _phi_ref(jnp.squeeze(x1, axis=1), params)
            return jnp.sum(v**2, axis=1, keepdims=True)[..., None] * sigma_f
        v = _phi_ref(x1, params)
        return v @ v.T * sigma_f
    if x1.ndim == 3:
        v1 = _phi_ref(jnp.squeeze(x1, axis=1), params)
        v2 = _phi_ref(jnp.squeeze(x2, axis=1), params)
        return jnp.sum(v1 * v2, axis=1, keepdims=True)[..., None] * sigma_f
    v1 = _phi_ref(x1, params)
    v2 = _phi_ref(x2, params)
    return v1 @ v2.T * sigma_f


# ----------------------------------------------------------------------------
# Main
# ----------------------------------------------------------------------------
if __name__ == "__main__":
    key = jax.random.PRNGKey(0)
    k_w1, k_w2, k_w3, k_x1, k_x2 = jax.random.split(key, 5)

    # Deterministic synthetic parameters for the covariate_net MLP.
    params = (
        jax.random.normal(k_w1, (D_IN, H_DIM), jnp.float32) * 0.3,
        jnp.zeros((1, H_DIM), jnp.float32),
        jax.random.normal(k_w2, (H_DIM, H_DIM), jnp.float32) * 0.2,
        jnp.zeros((1, H_DIM), jnp.float32),
        jax.random.normal(k_w3, (H_DIM, P_FEAT), jnp.float32) * 0.2,
        jnp.zeros((1, P_FEAT), jnp.float32),
    )

    N1, N2 = 8, 8
    x1_2d = jax.random.normal(k_x1, (N1, D_IN), jnp.float32)
    x2_2d = jax.random.normal(k_x2, (N2, D_IN), jnp.float32)
    x1_3d = x1_2d[:, None, :]   # [N, 1, D]
    x2_3d = x2_2d[:, None, :]

    # Branch 1: K(x1)         -> [N1, N1]
    out_a = neural_network_kernel_forward(x1_2d, params=params)
    # Branch 2: diag K(x1)    -> [N1, 1, 1]
    out_b = neural_network_kernel_forward(x1_3d, params=params)
    # Branch 3: diag K(x1,x2) -> [N1, 1, 1]
    out_c = neural_network_kernel_forward(x1_3d, x2_3d, params=params)
    # Branch 4: K(x1, x2)     -> [N1, N2]
    out_d = neural_network_kernel_forward(x1_2d, x2_2d, params=params)

    for o in (out_a, out_b, out_c, out_d):
        jax.block_until_ready(o)

    # Correctness check against pure-JAX reference (f32 everywhere -> tight tol).
    ref_a = _forward_ref(x1_2d, None, params, SIGMA_F)
    ref_b = _forward_ref(x1_3d, None, params, SIGMA_F)
    ref_c = _forward_ref(x1_3d, x2_3d, params, SIGMA_F)
    ref_d = _forward_ref(x1_2d, x2_2d, params, SIGMA_F)
    assert out_a.shape == (N1, N1) and jnp.allclose(out_a, ref_a, atol=1e-5)
    assert out_b.shape == (N1, 1, 1) and jnp.allclose(out_b, ref_b, atol=1e-5)
    assert out_c.shape == (N1, 1, 1) and jnp.allclose(out_c, ref_c, atol=1e-5)
    assert out_d.shape == (N1, N2) and jnp.allclose(out_d, ref_d, atol=1e-5)

    print("KERNEL_OK")
</pallas_src>

<mosaic_0001>
module attributes {stable_mosaic.version = 11 : i64} {
  func.func @_self_gram_kernel(%arg0: memref<8x8xf32, #tpu.memory_space<vmem>>, %arg1: memref<8x32xf32, #tpu.memory_space<vmem>>, %arg2: memref<1x32xf32, #tpu.memory_space<vmem>>, %arg3: memref<32x32xf32, #tpu.memory_space<vmem>>, %arg4: memref<1x32xf32, #tpu.memory_space<vmem>>, %arg5: memref<32x16xf32, #tpu.memory_space<vmem>>, %arg6: memref<1x16xf32, #tpu.memory_space<vmem>>, %arg7: memref<8x8xf32, #tpu.memory_space<vmem>>) attributes {dimension_semantics = [], scalar_prefetch = 0 : i64, scratch_operands = 0 : i64, tpu.core_type = #tpu.core_type<tc>} {
    %c0 = arith.constant 0 : index
    %c0_0 = arith.constant 0 : index
    %0 = vector.load %arg0[%c0, %c0_0] : memref<8x8xf32, #tpu.memory_space<vmem>>, vector<8x8xf32>
    %c0_1 = arith.constant 0 : index
    %c0_2 = arith.constant 0 : index
    %1 = vector.load %arg1[%c0_1, %c0_2] : memref<8x32xf32, #tpu.memory_space<vmem>>, vector<8x32xf32>
    %c0_3 = arith.constant 0 : index
    %c0_4 = arith.constant 0 : index
    %2 = vector.load %arg2[%c0_3, %c0_4] : memref<1x32xf32, #tpu.memory_space<vmem>>, vector<1x32xf32>
    %c0_5 = arith.constant 0 : index
    %c0_6 = arith.constant 0 : index
    %3 = vector.load %arg3[%c0_5, %c0_6] : memref<32x32xf32, #tpu.memory_space<vmem>>, vector<32x32xf32>
    %c0_7 = arith.constant 0 : index
    %c0_8 = arith.constant 0 : index
    %4 = vector.load %arg4[%c0_7, %c0_8] : memref<1x32xf32, #tpu.memory_space<vmem>>, vector<1x32xf32>
    %c0_9 = arith.constant 0 : index
    %c0_10 = arith.constant 0 : index
    %5 = vector.load %arg5[%c0_9, %c0_10] : memref<32x16xf32, #tpu.memory_space<vmem>>, vector<32x16xf32>
    %c0_11 = arith.constant 0 : index
    %c0_12 = arith.constant 0 : index
    %6 = vector.load %arg6[%c0_11, %c0_12] : memref<1x16xf32, #tpu.memory_space<vmem>>, vector<1x16xf32>
    %cst = arith.constant dense<0.000000e+00> : vector<8x32xf32>
    %7 = tpu.matmul %0, %1, %cst {dimension_numbers = #tpu.dot_dimension_numbers<[1], [0], [0], [1], [0, 0, 1, 1], [], []>} : vector<8x8xf32>, vector<8x32xf32>, vector<8x32xf32> -> vector<8x32xf32>
    %8 = vector.broadcast %2 : vector<1x32xf32> to vector<8x32xf32>
    %9 = arith.addf %7, %8 : vector<8x32xf32>
    %10 = math.tanh %9 : vector<8x32xf32>
    %cst_13 = arith.constant dense<0.000000e+00> : vector<8x32xf32>
    %11 = tpu.matmul %10, %3, %cst_13 {dimension_numbers = #tpu.dot_dimension_numbers<[1], [0], [0], [1], [0, 0, 1, 1], [], []>} : vector<8x32xf32>, vector<32x32xf32>, vector<8x32xf32> -> vector<8x32xf32>
    %12 = vector.broadcast %4 : vector<1x32xf32> to vector<8x32xf32>
    %13 = arith.addf %11, %12 : vector<8x32xf32>
    %14 = math.tanh %13 : vector<8x32xf32>
    %cst_14 = arith.constant dense<0.000000e+00> : vector<8x16xf32>
    %15 = tpu.matmul %14, %5, %cst_14 {dimension_numbers = #tpu.dot_dimension_numbers<[1], [0], [0], [1], [0, 0, 1, 1], [], []>} : vector<8x32xf32>, vector<32x16xf32>, vector<8x16xf32> -> vector<8x16xf32>
    %16 = vector.broadcast %6 : vector<1x16xf32> to vector<8x16xf32>
    %17 = arith.addf %15, %16 : vector<8x16xf32>
    %cst_15 = arith.constant dense<0.000000e+00> : vector<8x8xf32>
    %18 = tpu.matmul %17, %17, %cst_15 {dimension_numbers = #tpu.dot_dimension_numbers<[1], [1], [0], [0], [0, 0, 1, 0], [], []>} : vector<8x16xf32>, vector<8x16xf32>, vector<8x8xf32> -> vector<8x8xf32>
    %cst_16 = arith.constant 5.000000e-01 : f32
    %19 = vector.broadcast %cst_16 : f32 to vector<8x8xf32>
    %20 = arith.mulf %18, %19 : vector<8x8xf32>
    %c0_17 = arith.constant 0 : index
    %c0_18 = arith.constant 0 : index
    %21 = vector.load %arg7[%c0_17, %c0_18] : memref<8x8xf32, #tpu.memory_space<vmem>>, vector<8x8xf32>
    tpu.vector_store %arg7[%c0_17, %c0_18], %20 {strides = array<i32>} : memref<8x8xf32, #tpu.memory_space<vmem>>, vector<8x8xf32>,
    return
  }
}

</mosaic_0001>

<llo_original>
// kernel: neural_network_kernel_forward.1
$region0: #{neural_network_kernel_forward.1}
  #allocation0 [shape = 'u32[]', space=smem, size = 0x4, offset = 0x4, fixed_abs, tag = 'smem constant byte address 0x4 - core index']
  #allocation1 [shape = 'u32[144,128]{1,0:T(1,128)}', space=vmem, size = 0x12000, scoped, tag = 'internal scratch']
  %s0 = inlined_call_operand.vmem [shape: f32[8,8], index: 0, kind: input, shape index: {}]
  %s1 = inlined_call_operand.vmem [shape: f32[8,32], index: 1, kind: input, shape index: {}]
  %s2 = inlined_call_operand.vmem [shape: f32[1,32], index: 2, kind: input, shape index: {}]
  %s3 = inlined_call_operand.vmem [shape: f32[32,32], index: 3, kind: input, shape index: {}]
  %s4 = inlined_call_operand.vmem [shape: f32[1,32], index: 4, kind: input, shape index: {}]
  %s5 = inlined_call_operand.vmem [shape: f32[32,16], index: 5, kind: input, shape index: {}]
  %s6 = inlined_call_operand.vmem [shape: f32[1,16], index: 6, kind: input, shape index: {}]
  %s7 = inlined_call_operand.hbm [shape: f32[8,8], index: 7, kind: output, shape index: {}]
  %s8 = sld [smem:[#allocation0]]
  $region38: #{neural_network_kernel_forward.1} parent=0
    _
  %s10 = ssub.s32 1, %s8
  %s11 = scalar_select 0, %s10, %s8
  $region1: #{neural_network_kernel_forward.1} parent=0
    #allocation2 [shape = 'u8[4096]{0}', space=vmem, size = 0x1000, scoped, tag = 'output window, operand 0, single buffered']
    #allocation3 [shape = 's32[1]{0}', space=sflag, size = 0x4, scoped, tag = 'scoped memory for neural_network_kernel_forward.1']
    %12 = vsyncpa [#allocation3], 0
    // Predicated region
    $region2: #{neural_network_kernel_forward.1} parent=1 // pred_check
      _
    $region3: #{neural_network_kernel_forward.1} parent=1 // pred_check_branch
      %14 = sbr.rel (0) target = $region5
    $region4: #{neural_network_kernel_forward.1} parent=1 // pred_region
      _
    $region5: #{neural_network_kernel_forward.1} parent=1 // pred_fallthru
      _
    // Predicated region
    $region6: #{neural_network_kernel_forward.1} parent=1 // pred_check
      _
    $region7: #{neural_network_kernel_forward.1} parent=1 // pred_check_branch
      %16 = sbr.rel (0) target = $region9
    $region8: #{neural_network_kernel_forward.1} parent=1 // pred_region
      _
    $region9: #{neural_network_kernel_forward.1} parent=1 // pred_fallthru
      _
    // Predicated region
    $region10: #{neural_network_kernel_forward.1} parent=1 // pred_check
      _
    $region11: #{neural_network_kernel_forward.1} parent=1 // pred_check_branch
      %18 = sbr.rel (0) target = $region13
    $region12: #{neural_network_kernel_forward.1} parent=1 // pred_region
      _
    $region13: #{neural_network_kernel_forward.1} parent=1 // pred_fallthru
      _
    // Predicated region
    $region14: #{neural_network_kernel_forward.1} parent=1 // pred_check
      _
    $region15: #{neural_network_kernel_forward.1} parent=1 // pred_check_branch
      %20 = sbr.rel (0) target = $region17
    $region16: #{neural_network_kernel_forward.1} parent=1 // pred_region
      _
    $region17: #{neural_network_kernel_forward.1} parent=1 // pred_fallthru
      _
    // Predicated region
    $region18: #{neural_network_kernel_forward.1} parent=1 // pred_check
      _
    $region19: #{neural_network_kernel_forward.1} parent=1 // pred_check_branch
      %22 = sbr.rel (0) target = $region21
    $region20: #{neural_network_kernel_forward.1} parent=1 // pred_region
      _
    $region21: #{neural_network_kernel_forward.1} parent=1 // pred_fallthru
      _
    // Predicated region
    $region22: #{neural_network_kernel_forward.1} parent=1 // pred_check
      _
    $region23: #{neural_network_kernel_forward.1} parent=1 // pred_check_branch
      %24 = sbr.rel (0) target = $region25
    $region24: #{neural_network_kernel_forward.1} parent=1 // pred_region
      _
    $region25: #{neural_network_kernel_forward.1} parent=1 // pred_fallthru
      _
    // Predicated region
    $region26: #{neural_network_kernel_forward.1} parent=1 // pred_check
      _
    $region27: #{neural_network_kernel_forward.1} parent=1 // pred_check_branch
      %26 = sbr.rel (0) target = $region29
    $region28: #{neural_network_kernel_forward.1} parent=1 // pred_region
      _
    $region29: #{neural_network_kernel_forward.1} parent=1 // pred_fallthru
      _
    %v27 = vld [vmem:[%s0] sm:$0xff]
    %v28 = vld [vmem:[%s1] sm:$0xff]
    %v29 = vld [vmem:[%s2] sm:$0x1]
    %v30 = vld [vmem:[%s3] sm:$0xff]
    %v31 = vld [vmem:[%s3 + $0x8] sm:$0xff]
    %v32 = vld [vmem:[%s3 + $0x10] sm:$0xff]
    %v33 = vld [vmem:[%s3 + $0x18] sm:$0xff]
    %v34 = vld [vmem:[%s4] sm:$0x1]
    %v35 = vld [vmem:[%s5] sm:$0xff]
    %v36 = vld [vmem:[%s5 + $0x8] sm:$0xff]
    %v37 = vld [vmem:[%s5 + $0x10] sm:$0xff]
    %v38 = vld [vmem:[%s5 + $0x18] sm:$0xff]
    %v39 = vld [vmem:[%s6] sm:$0x1]
    %v41 = vlaneseq
    %v42 = vshrl.u32 %v41, 7
    %v43 = vsub.s32 0, %v42
    %v44 = vrot.slane %v29, %v43
    %vm46 = vcmask 64512
    %v48 = vsel %vm46, %v27, 0
    %50 = vmatprep.subr.mxu0 0.0
    %51 = vmatpush1.msra.mxu0 0.0
    %52 = vmatprep.subr.mxu0 0.0
    %53 = vmatpush1.msra.mxu0 0.0
    %54 = vmatprep.subr.mxu0 0.0
    %55 = vmatpush1.msra.mxu0 0.0
    %56 = vmatprep.subr.mxu0 0.0
    %57 = vmatpush1.msra.mxu0 0.0
    %58 = vmatprep.subr.mxu0 0.0
    %59 = vmatpush1.msra.mxu0 0.0
    %60 = vmatprep.subr.mxu0 0.0
    %61 = vmatpush1.msra.mxu0 0.0
    %62 = vmatprep.subr.mxu0 0.0
    %63 = vmatpush1.msra.mxu0 0.0
    %64 = vmatprep.subr.mxu0 0.0
    %65 = vmatpush1.msra.mxu0 0.0
    %66 = vmatprep.subr.mxu0 0.0
    %67 = vmatpush1.msra.mxu0 0.0
    %68 = vmatprep.subr.mxu0 0.0
    %69 = vmatpush1.msra.mxu0 0.0
    %70 = vmatprep.subr.mxu0 0.0
    %71 = vmatpush1.msra.mxu0 0.0
    %72 = vmatprep.subr.mxu0 0.0
    %73 = vmatpush1.msra.mxu0 0.0
    %74 = vmatprep.subr.mxu0 0.0
    %75 = vmatpush1.msra.mxu0 0.0
    %76 = vmatprep.subr.mxu0 0.0
    %77 = vmatpush1.msra.mxu0 0.0
    %78 = vmatprep.subr.mxu0 0.0
    %79 = vmatpush1.msra.mxu0 0.0
    %80 = vmatprep.subr.mxu0 0.0
    %81 = vmatpush1.msra.mxu0 %v28
    %82 = vmatprep.subr.mxu0 0.0
    %83 = vmatpush2.msra.mxu0 0.0
    %84 = vmatprep.subr.mxu0 0.0
    %85 = vmatpush2.msra.mxu0 0.0
    %86 = vmatprep.subr.mxu0 0.0
    %87 = vmatpush2.msra.mxu0 0.0
    %88 = vmatprep.subr.mxu0 0.0
    %89 = vmatpush2.msra.mxu0 0.0
    %90 = vmatprep.subr.mxu0 0.0
    %91 = vmatpush2.msra.mxu0 0.0
    %92 = vmatprep.subr.mxu0 0.0
    %93 = vmatpush2.msra.mxu0 0.0
    %94 = vmatprep.subr.mxu0 0.0
    %95 = vmatpush2.msra.mxu0 0.0
    %96 = vmatprep.subr.mxu0 0.0
    %97 = vmatpush2.msra.mxu0 0.0
    %98 = vmatprep.subr.mxu0 0.0
    %99 = vmatpush2.msra.mxu0 0.0
    %100 = vmatprep.subr.mxu0 0.0
    %101 = vmatpush2.msra.mxu0 0.0
    %102 = vmatprep.subr.mxu0 0.0
    %103 = vmatpush2.msra.mxu0 0.0
    %104 = vmatprep.subr.mxu0 0.0
    %105 = vmatpush2.msra.mxu0 0.0
    %106 = vmatprep.subr.mxu0 0.0
    %107 = vmatpush2.msra.mxu0 0.0
    %108 = vmatprep.subr.mxu0 0.0
    %109 = vmatpush2.msra.mxu0 0.0
    %110 = vmatprep.subr.mxu0 0.0
    %111 = vmatpush2.msra.mxu0 0.0
    %112 = vmatprep.subr.mxu0 0.0
    %113 = vmatpush2.msra.mxu0 0.0
    %114 = vmatprep.mubr.f32.mxu0 0.0
    %115 = vmatmul.mubr.f32.gmra.mxu0 %v48
    %v116 = vpop.f32.mrf.mxu0
    %v117 = vadd.f32 %v44, %v116
    %v118 = vpop.f32.mrf.mxu0
    %119 = vdwg.mxu0
    %v120 = vtanh.pop %v117
    %v122 = vlaneseq
    %v123 = vshrl.u32 %v122, 7
    %v124 = vsub.s32 0, %v123
    %v125 = vrot.slane %v34, %v124
    %vm127 = vcmask 261120
    %v129 = vsel %vm127, %v120, 0
    %131 = vmatprep.subr.mxu0 0.0
    %132 = vmatpush1.msra.mxu0 0.0
    %133 = vmatprep.subr.mxu0 0.0
    %134 = vmatpush1.msra.mxu0 0.0
    %135 = vmatprep.subr.mxu0 0.0
    %136 = vmatpush1.msra.mxu0 0.0
    %137 = vmatprep.subr.mxu0 0.0
    %138 = vmatpush1.msra.mxu0 0.0
    %139 = vmatprep.subr.mxu0 0.0
    %140 = vmatpush1.msra.mxu0 0.0
    %141 = vmatprep.subr.mxu0 0.0
    %142 = vmatpush1.msra.mxu0 0.0
    %143 = vmatprep.subr.mxu0 0.0
    %144 = vmatpush1.msra.mxu0 0.0
    %145 = vmatprep.subr.mxu0 0.0
    %146 = vmatpush1.msra.mxu0 0.0
    %147 = vmatprep.subr.mxu0 0.0
    %148 = vmatpush1.msra.mxu0 0.0
    %149 = vmatprep.subr.mxu0 0.0
    %150 = vmatpush1.msra.mxu0 0.0
    %151 = vmatprep.subr.mxu0 0.0
    %152 = vmatpush1.msra.mxu0 0.0
    %153 = vmatprep.subr.mxu0 0.0
    %154 = vmatpush1.msra.mxu0 0.0
    %155 = vmatprep.subr.mxu0 0.0
    %156 = vmatpush1.msra.mxu0 %v33
    %157 = vmatprep.subr.mxu0 0.0
    %158 = vmatpush1.msra.mxu0 %v32
    %159 = vmatprep.subr.mxu0 0.0
    %160 = vmatpush1.msra.mxu0 %v31
    %161 = vmatprep.subr.mxu0 0.0
    %162 = vmatpush1.msra.mxu0 %v30
    %163 = vmatprep.subr.mxu0 0.0
    %164 = vmatpush2.msra.mxu0 0.0
    %165 = vmatprep.subr.mxu0 0.0
    %166 = vmatpush2.msra.mxu0 0.0
    %167 = vmatprep.subr.mxu0 0.0
    %168 = vmatpush2.msra.mxu0 0.0
    %169 = vmatprep.subr.mxu0 0.0
    %170 = vmatpush2.msra.mxu0 0.0
    %171 = vmatprep.subr.mxu0 0.0
    %172 = vmatpush2.msra.mxu0 0.0
    %173 = vmatprep.subr.mxu0 0.0
    %174 = vmatpush2.msra.mxu0 0.0
    %175 = vmatprep.subr.mxu0 0.0
    %176 = vmatpush2.msra.mxu0 0.0
    %177 = vmatprep.subr.mxu0 0.0
    %178 = vmatpush2.msra.mxu0 0.0
    %179 = vmatprep.subr.mxu0 0.0
    %180 = vmatpush2.msra.mxu0 0.0
    %181 = vmatprep.subr.mxu0 0.0
    %182 = vmatpush2.msra.mxu0 0.0
    %183 = vmatprep.subr.mxu0 0.0
    %184 = vmatpush2.msra.mxu0 0.0
    %185 = vmatprep.subr.mxu0 0.0
    %186 = vmatpush2.msra.mxu0 0.0
    %187 = vmatprep.subr.mxu0 0.0
    %188 = vmatpush2.msra.mxu0 0.0
    %189 = vmatprep.subr.mxu0 0.0
    %190 = vmatpush2.msra.mxu0 0.0
    %191 = vmatprep.subr.mxu0 0.0
    %192 = vmatpush2.msra.mxu0 0.0
    %193 = vmatprep.subr.mxu0 0.0
    %194 = vmatpush2.msra.mxu0 0.0
    %195 = vmatprep.mubr.f32.mxu0 0.0
    %196 = vmatmul.mubr.f32.gmra.mxu0 %v129
    %v197 = vpop.f32.mrf.mxu0
    %v198 = vadd.f32 %v125, %v197
    %v199 = vpop.f32.mrf.mxu0
    %200 = vdwg.mxu0
    %v201 = vtanh.pop %v198
    %v203 = vlaneseq
    %v204 = vshrl.u32 %v203, 7
    %v205 = vsub.s32 0, %v204
    %v206 = vrot.slane %v39, %v205
    %v209 = vsel %vm127, %v201, 0
    %211 = vmatprep.subr.mxu0 0.0
    %212 = vmatpush1.msra.mxu0 0.0
    %213 = vmatprep.subr.mxu0 0.0
    %214 = vmatpush1.msra.mxu0 0.0
    %215 = vmatprep.subr.mxu0 0.0
    %216 = vmatpush1.msra.mxu0 0.0
    %217 = vmatprep.subr.mxu0 0.0
    %218 = vmatpush1.msra.mxu0 0.0
    %219 = vmatprep.subr.mxu0 0.0
    %220 = vmatpush1.msra.mxu0 0.0
    %221 = vmatprep.subr.mxu0 0.0
    %222 = vmatpush1.msra.mxu0 0.0
    %223 = vmatprep.subr.mxu0 0.0
    %224 = vmatpush1.msra.mxu0 0.0
    %225 = vmatprep.subr.mxu0 0.0
    %226 = vmatpush1.msra.mxu0 0.0
    %227 = vmatprep.subr.mxu0 0.0
    %228 = vmatpush1.msra.mxu0 0.0
    %229 = vmatprep.subr.mxu0 0.0
    %230 = vmatpush1.msra.mxu0 0.0
    %231 = vmatprep.subr.mxu0 0.0
    %232 = vmatpush1.msra.mxu0 0.0
    %233 = vmatprep.subr.mxu0 0.0
    %234 = vmatpush1.msra.mxu0 0.0
    %235 = vmatprep.subr.mxu0 0.0
    %236 = vmatpush1.msra.mxu0 %v38
    %237 = vmatprep.subr.mxu0 0.0
    %238 = vmatpush1.msra.mxu0 %v37
    %239 = vmatprep.subr.mxu0 0.0
    %240 = vmatpush1.msra.mxu0 %v36
    %241 = vmatprep.subr.mxu0 0.0
    %242 = vmatpush1.msra.mxu0 %v35
    %243 = vmatprep.subr.mxu0 0.0
    %244 = vmatpush2.msra.mxu0 0.0
    %245 = vmatprep.subr.mxu0 0.0
    %246 = vmatpush2.msra.mxu0 0.0
    %247 = vmatprep.subr.mxu0 0.0
    %248 = vmatpush2.msra.mxu0 0.0
    %249 = vmatprep.subr.mxu0 0.0
    %250 = vmatpush2.msra.mxu0 0.0
    %251 = vmatprep.subr.mxu0 0.0
    %252 = vmatpush2.msra.mxu0 0.0
    %253 = vmatprep.subr.mxu0 0.0
    %254 = vmatpush2.msra.mxu0 0.0
    %255 = vmatprep.subr.mxu0 0.0
    %256 = vmatpush2.msra.mxu0 0.0
    %257 = vmatprep.subr.mxu0 0.0
    %258 = vmatpush2.msra.mxu0 0.0
    %259 = vmatprep.subr.mxu0 0.0
    %260 = vmatpush2.msra.mxu0 0.0
    %261 = vmatprep.subr.mxu0 0.0
    %262 = vmatpush2.msra.mxu0 0.0
    %263 = vmatprep.subr.mxu0 0.0
    %264 = vmatpush2.msra.mxu0 0.0
    %265 = vmatprep.subr.mxu0 0.0
    %266 = vmatpush2.msra.mxu0 0.0
    %267 = vmatprep.subr.mxu0 0.0
    %268 = vmatpush2.msra.mxu0 0.0
    %269 = vmatprep.subr.mxu0 0.0
    %270 = vmatpush2.msra.mxu0 0.0
    %271 = vmatprep.subr.mxu0 0.0
    %272 = vmatpush2.msra.mxu0 0.0
    %273 = vmatprep.subr.mxu0 0.0
    %274 = vmatpush2.msra.mxu0 0.0
    %275 = vmatprep.mubr.f32.mxu0 0.0
    %276 = vmatmul.mubr.f32.gmra.mxu0 %v209
    %v277 = vpop.f32.mrf.mxu0
    %v278 = vadd.f32 %v206, %v277
    %v279 = vpop.f32.mrf.mxu0
    %280 = vdwg.mxu0
    %vm281 = vcmask 130048
    %v283 = vsel %vm281, %v278, 0
    %285 = vmatprep.subr.mxu0 0.0
    %286 = vmatpush1.xpose.msra.mxu0 0.0
    %287 = vmatprep.subr.mxu0 0.0
    %288 = vmatpush1.xpose.msra.mxu0 0.0
    %289 = vmatprep.subr.mxu0 0.0
    %290 = vmatpush1.xpose.msra.mxu0 0.0
    %291 = vmatprep.subr.mxu0 0.0
    %292 = vmatpush1.xpose.msra.mxu0 0.0
    %293 = vmatprep.subr.mxu0 0.0
    %294 = vmatpush1.xpose.msra.mxu0 0.0
    %295 = vmatprep.subr.mxu0 0.0
    %296 = vmatpush1.xpose.msra.mxu0 0.0
    %297 = vmatprep.subr.mxu0 0.0
    %298 = vmatpush1.xpose.msra.mxu0 0.0
    %299 = vmatprep.subr.mxu0 0.0
    %300 = vmatpush1.xpose.msra.mxu0 0.0
    %301 = vmatprep.subr.mxu0 0.0
    %302 = vmatpush1.xpose.msra.mxu0 0.0
    %303 = vmatprep.subr.mxu0 0.0
    %304 = vmatpush1.xpose.msra.mxu0 0.0
    %305 = vmatprep.subr.mxu0 0.0
    %306 = vmatpush1.xpose.msra.mxu0 0.0
    %307 = vmatprep.subr.mxu0 0.0
    %308 = vmatpush1.xpose.msra.mxu0 0.0
    %309 = vmatprep.subr.mxu0 0.0
    %310 = vmatpush1.xpose.msra.mxu0 0.0
    %311 = vmatprep.subr.mxu0 0.0
    %312 = vmatpush1.xpose.msra.mxu0 0.0
    %313 = vmatprep.subr.mxu0 0.0
    %314 = vmatpush1.xpose.msra.mxu0 0.0
    %315 = vmatprep.subr.mxu0 0.0
    %316 = vmatpush1.xpose.msra.mxu0 %v283
    %317 = vmatprep.subr.mxu0 0.0
    %318 = vmatpush2.xpose.msra.mxu0 0.0
    %319 = vmatprep.subr.mxu0 0.0
    %320 = vmatpush2.xpose.msra.mxu0 0.0
    %321 = vmatprep.subr.mxu0 0.0
    %322 = vmatpush2.xpose.msra.mxu0 0.0
    %323 = vmatprep.subr.mxu0 0.0
    %324 = vmatpush2.xpose.msra.mxu0 0.0
    %325 = vmatprep.subr.mxu0 0.0
    %326 = vmatpush2.xpose.msra.mxu0 0.0
    %327 = vmatprep.subr.mxu0 0.0
    %328 = vmatpush2.xpose.msra.mxu0 0.0
    %329 = vmatprep.subr.mxu0 0.0
    %330 = vmatpush2.xpose.msra.mxu0 0.0
    %331 = vmatprep.subr.mxu0 0.0
    %332 = vmatpush2.xpose.msra.mxu0 0.0
    %333 = vmatprep.subr.mxu0 0.0
    %334 = vmatpush2.xpose.msra.mxu0 0.0
    %335 = vmatprep.subr.mxu0 0.0
    %336 = vmatpush2.xpose.msra.mxu0 0.0
    %337 = vmatprep.subr.mxu0 0.0
    %338 = vmatpush2.xpose.msra.mxu0 0.0
    %339 = vmatprep.subr.mxu0 0.0
    %340 = vmatpush2.xpose.msra.mxu0 0.0
    %341 = vmatprep.subr.mxu0 0.0
    %342 = vmatpush2.xpose.msra.mxu0 0.0
    %343 = vmatprep.subr.mxu0 0.0
    %344 = vmatpush2.xpose.msra.mxu0 0.0
    %345 = vmatprep.subr.mxu0 0.0
    %346 = vmatpush2.xpose.msra.mxu0 0.0
    %347 = vmatprep.subr.mxu0 0.0
    %348 = vmatpush2.xpose.msra.mxu0 0.0
    %349 = vmatprep.mubr.f32.mxu0 0.0
    %350 = vmatmul.mubr.f32.gmra.mxu0 %v283
    %v351 = vpop.f32.mrf.mxu0
    %v352 = vadd.f32 0.0, %v351
    %v353 = vpop.f32.mrf.mxu0
    %354 = vdwg.mxu0
    %v355 = vmul.f32 %v352, 0.5
    %356 = vst.msk [vmem:[#allocation2] sm:$0xff] %vm46, %v355
    // Predicated region
    $region30: #{neural_network_kernel_forward.1} parent=1 // pred_check
      _
    $region31: #{neural_network_kernel_forward.1} parent=1 // pred_check_branch
      %358 = sbr.rel (0) target = $region33
    $region32: #{neural_network_kernel_forward.1} parent=1 // pred_region
      %s360 = ssub.s32 128, 128
      %361 = vsyncadd [#allocation3], %s360
      %s363 = sshll.u32 [#allocation2], 4
      %s364 = int_to_ptr.vmem [resolvable:$true] %s363
      %366 = dma.vmem_to_hbm [thread:$0]  %s364, 128, %s7, [#allocation3]
    $region33: #{neural_network_kernel_forward.1} parent=1 // pred_fallthru
      _
    // Predicated region
    $region34: #{neural_network_kernel_forward.1} parent=1 // pred_check
      _
    $region35: #{neural_network_kernel_forward.1} parent=1 // pred_check_branch
      %368 = sbr.rel (0) target = $region37
    $region36: #{neural_network_kernel_forward.1} parent=1 // pred_region
      %369 = dma.done [#allocation3], 128
    $region37: #{neural_network_kernel_forward.1} parent=1 // pred_fallthru
      _
    %370 = vsyncpa [#allocation3], 1

</llo_original>
